<compile_context>
chip_gen: v7x
topology: tpu7x:2x2x1
jax: 0.10.0
libtpu: 0.0.40
codegen_flags: <defaults>
</compile_context>

<pallas_src>
from dataclasses import dataclass

import jax
import jax.numpy as jnp
from jax.experimental import pallas as pl
from jax.experimental.pallas import tpu as pltpu

_LANE = 128
_MAX_TM = 4096              # 4096*128*4 B = 2 MiB per f32 input block
                            # peak VMEM: 2 inputs * 2 bufs * 2 MiB + 2 MiB acc ~ 18 MiB
_PALLAS_MIN_ELEMS = 4096    # below this, plain JAX wins (launch/glue overhead)


def _round_down(x, m):
    return (x // m) * m


def _make_sse_kernel(tm, bps, valid_rows, last_block, need_mask):
    """Sum-of-squared-errors over (tm, 128) tiles.

    grid = (n_split, bps): axis 0 is 'parallel' (megacore split on v7x),
    axis 1 is the 'arbitrary' reduction axis with the accumulator resident.
    """

    def kernel(p_ref, l_ref, o_ref, acc_ref):
        s = pl.program_id(0)    # parallel split axis
        b = pl.program_id(1)    # reduction axis

        @pl.when(b == 0)
        def _():
            acc_ref[...] = jnp.zeros_like(acc_ref)

        # Upcast in-register (bf16 inputs stream as bf16 -> half HBM traffic).
        d = p_ref[...].astype(jnp.float32) - l_ref[...].astype(jnp.float32)
        sq = d * d

        if need_mask:
            # Only the very last (ragged) block carries garbage rows from the
            # Pallas edge-block padding; every other block takes the cheap
            # unmasked path (pure VPU accumulate).
            blk = s * bps + b
            is_edge = blk == last_block

            @pl.when(jnp.logical_not(is_edge))
            def _():
                acc_ref[...] += sq

            @pl.when(is_edge)
            def _():
                row = blk * tm + jax.lax.broadcasted_iota(
                    jnp.int32, (tm, _LANE), 0)
                acc_ref[...] += jnp.where(row < valid_rows, sq, 0.0)
        else:
            acc_ref[...] += sq

        @pl.when(b == bps - 1)
        def _():
            # One sublane reduce in the epilogue; lane reduce finishes in JAX.
            o_ref[...] = jnp.sum(acc_ref[...], axis=0, keepdims=True)[None]

    return kernel


def _sum_squared_error_pallas(pred, label, max_tm=_MAX_TM):
    """sum((pred - label)^2) over all elements, Pallas-accelerated."""
    p = jnp.asarray(pred)
    l = jnp.asarray(label)
    if p.dtype != l.dtype or p.dtype not in (jnp.float32, jnp.bfloat16):
        p = p.astype(jnp.float32)
        l = l.astype(jnp.float32)

    n = int(p.size)
    p = p.reshape(-1)
    l = l.reshape(-1)

    rows = pl.cdiv(n, _LANE)
    n_lane_pad = rows * _LANE
    if n_lane_pad != n:
        # Lane-unaligned sizes need one XLA copy; lane-aligned reshapes below
        # are free (no HBM traffic).
        p = jnp.pad(p, (0, n_lane_pad - n))
        l = jnp.pad(l, (0, n_lane_pad - n))
    p2 = p.reshape(rows, _LANE)
    l2 = l.reshape(rows, _LANE)

    # Row tile: multiple of 16 (valid sublane alignment for both f32 and bf16),
    # never larger than the array (ragged last block handled by masking).
    tm = min(max_tm, max(16, _round_down(rows, 16)))
    total_blocks = pl.cdiv(rows, tm)
    # 2-way split lets both v7x TensorCores stream data; only when it divides
    # evenly (no ghost blocks -> no wasted HBM traffic on single-TC chips).
    n_split = 2 if (total_blocks >= 2 and total_blocks % 2 == 0) else 1
    bps = total_blocks // n_split
    need_mask = (total_blocks * tm != rows)

    kernel = _make_sse_kernel(tm, bps, rows, total_blocks - 1, need_mask)
    in_map = lambda s, b: (s * bps + b, 0)

    out = pl.pallas_call(
        kernel,
        out_shape=jax.ShapeDtypeStruct((n_split, 1, _LANE), jnp.float32),
        grid_spec=pltpu.PrefetchScalarGridSpec(
            num_scalar_prefetch=0,
            grid=(n_split, bps),
            in_specs=[
                pl.BlockSpec((tm, _LANE), in_map),
                pl.BlockSpec((tm, _LANE), in_map),
            ],
            out_specs=pl.BlockSpec((1, 1, _LANE), lambda s, b: (s, 0, 0)),
            scratch_shapes=[pltpu.VMEM((tm, _LANE), jnp.float32)],
        ),
        compiler_params=pltpu.CompilerParams(
            dimension_semantics=("parallel", "arbitrary"),
        ),
    )(p2, l2)
    # Final lane (and split) reduction: at most 2*128 values, negligible in JAX.
    return jnp.sum(out)


def mse_loss_pallas(pred, label):
    """Equivalent of nn.MSELoss() (mean reduction).

    Pallas path for large tensors; plain JAX for tiny tensors where a
    pallas_call launch would dominate.
    """
    p = jnp.asarray(pred)
    l = jnp.asarray(label)
    n = int(p.size)
    if n < _PALLAS_MIN_ELEMS:
        return jnp.mean((p.astype(jnp.float32) - l.astype(jnp.float32)) ** 2)
    return _sum_squared_error_pallas(p, l) / jnp.float32(n)


@dataclass
class constraint:
    name: str
    kernel: object  # callable(pred_tensor, label_tensor) -> scalar
    target: str
    label: str
    weight: float


class Constraint:
    """JAX/Pallas port of molpot.constrain.base.Constraint."""

    def __init__(self):
        self._constraints = {}
        self._metrics = []

    def add(self, name, kernel, target, label, weight=1.0, log=False):
        self._constraints[name] = constraint(name, kernel, target, label, weight)
        if log:
            self._metrics.append(name)

    def forward(self, pred, label):
        losses = [
            c.weight * c.kernel(pred[c.target], label[c.label])
            for c in self._constraints.values()
        ]
        return jnp.sum(jnp.stack(losses))

    __call__ = forward

    def get_constraint(self, name):
        return self._constraints[name]


if __name__ == "__main__":
    key = jax.random.PRNGKey(0)
    ks = jax.random.split(key, 12)

    # Small synthetic molecular-potential style batch.
    B, A = 2, 8
    pred = {
        "energy": jax.random.normal(ks[0], (B,), jnp.float32),                    # tiny -> JAX path
        "forces": jax.random.normal(ks[1], (B, A, 3), jnp.float32),               # tiny -> JAX path
        "virial": jax.random.normal(ks[2], (B, 48, 128), jnp.float32),            # Pallas, aligned
        "charge_density": jax.random.normal(ks[3], (B, 64, 128), jnp.bfloat16),   # Pallas, bf16
        "descriptors": jax.random.normal(ks[4], (B, 97, 53), jnp.float32),        # Pallas, masked + split
    }
    label = {
        "energy": jax.random.normal(ks[5], (B,), jnp.float32),
        "forces": jax.random.normal(ks[6], (B, A, 3), jnp.float32),
        "virial": jax.random.normal(ks[7], (B, 48, 128), jnp.float32),
        "charge_density": jax.random.normal(ks[8], (B, 64, 128), jnp.bfloat16),
        "descriptors": jax.random.normal(ks[9], (B, 97, 53), jnp.float32),
    }

    cons = Constraint()
    cons.add("energy", mse_loss_pallas, target="energy", label="energy", weight=1.0, log=True)
    cons.add("forces", mse_loss_pallas, target="forces", label="forces", weight=100.0, log=True)
    cons.add("virial", mse_loss_pallas, target="virial", label="virial", weight=0.5)
    cons.add("charge_density", mse_loss_pallas,
             target="charge_density", label="charge_density", weight=2.0)
    cons.add("descriptors", mse_loss_pallas, target="descriptors", label="descriptors", weight=1.0)

    out = cons(pred, label)
    out = jax.block_until_ready(out)

    # Pure-JAX reference (matches torch.sum(stack([w * MSE(...)]))).
    def _ref_mse(p, l):
        p = jnp.asarray(p, jnp.float32)
        l = jnp.asarray(l, jnp.float32)
        return jnp.mean((p - l) ** 2)

    ref = (
        1.0 * _ref_mse(pred["energy"], label["energy"])
        + 100.0 * _ref_mse(pred["forces"], label["forces"])
        + 0.5 * _ref_mse(pred["virial"], label["virial"])
        + 2.0 * _ref_mse(pred["charge_density"], label["charge_density"])
        + 1.0 * _ref_mse(pred["descriptors"], label["descriptors"])
    )
    assert jnp.allclose(out, ref, rtol=1e-5, atol=1e-5), (out, ref)

    # Extra check: force a small row tile so the kernel exercises multi-step
    # accumulation across the reduction axis + split + masked edge block.
    px = jax.random.normal(ks[10], (4, 97, 53), jnp.float32)
    lx = jax.random.normal(ks[11], (4, 97, 53), jnp.float32)
    got = jax.block_until_ready(_sum_squared_error_pallas(px, lx, max_tm=32))
    want = jnp.sum((px - lx) ** 2)
    assert jnp.allclose(got, want, rtol=1e-5, atol=1e-4), (got, want)

    print("KERNEL_OK")
</pallas_src>

<mosaic_0001>
module attributes {stable_mosaic.version = 11 : i64} {
  func.func @kernel(%arg0: i32, %arg1: i32, %arg2: memref<96x128xf32, #tpu.memory_space<vmem>>, %arg3: memref<96x128xf32, #tpu.memory_space<vmem>>, %arg4: memref<1x1x128xf32, #tpu.memory_space<vmem>>, %arg5: memref<96x128xf32, #tpu.memory_space<vmem>>) attributes {dimension_semantics = [#tpu.dimension_semantics<parallel>, #tpu.dimension_semantics<arbitrary>], iteration_bounds = array<i64: 1, 1>, scalar_prefetch = 0 : i64, scratch_operands = 1 : i64, tpu.core_type = #tpu.core_type<tc>, window_params = [{transform_indices = @transform_0, window_bounds = array<i64: 96, 128>}, {transform_indices = @transform_1, window_bounds = array<i64: 96, 128>}, {transform_indices = @transform_2, window_bounds = array<i64: 1, 1, 128>}]} {
    %c0_i32 = arith.constant 0 : i32
    %0 = arith.cmpi eq, %arg1, %c0_i32 : i32
    %1 = arith.extui %0 : i1 to i32
    %c0_i32_0 = arith.constant 0 : i32
    %2 = arith.cmpi ne, %1, %c0_i32_0 : i32
    scf.if %2 {
      %cst = arith.constant 0.000000e+00 : f32
      %13 = vector.broadcast %cst : f32 to vector<96x128xf32>
      %c0_10 = arith.constant 0 : index
      %c0_11 = arith.constant 0 : index
      %14 = vector.load %arg5[%c0_10, %c0_11] : memref<96x128xf32, #tpu.memory_space<vmem>>, vector<96x128xf32>
      tpu.vector_store %arg5[%c0_10, %c0_11], %13 {strides = array<i32>} : memref<96x128xf32, #tpu.memory_space<vmem>>, vector<96x128xf32>,
    } else {
    }
    %c0 = arith.constant 0 : index
    %c0_1 = arith.constant 0 : index
    %3 = vector.load %arg2[%c0, %c0_1] : memref<96x128xf32, #tpu.memory_space<vmem>>, vector<96x128xf32>
    %c0_2 = arith.constant 0 : index
    %c0_3 = arith.constant 0 : index
    %4 = vector.load %arg3[%c0_2, %c0_3] : memref<96x128xf32, #tpu.memory_space<vmem>>, vector<96x128xf32>
    %5 = arith.subf %3, %4 : vector<96x128xf32>
    %6 = arith.mulf %5, %5 : vector<96x128xf32>
    %c0_4 = arith.constant 0 : index
    %c0_5 = arith.constant 0 : index
    %7 = vector.load %arg5[%c0_4, %c0_5] : memref<96x128xf32, #tpu.memory_space<vmem>>, vector<96x128xf32>
    %8 = arith.addf %7, %6 : vector<96x128xf32>
    %c0_6 = arith.constant 0 : index
    %c0_7 = arith.constant 0 : index
    %9 = vector.load %arg5[%c0_6, %c0_7] : memref<96x128xf32, #tpu.memory_space<vmem>>, vector<96x128xf32>
    tpu.vector_store %arg5[%c0_6, %c0_7], %8 {strides = array<i32>} : memref<96x128xf32, #tpu.memory_space<vmem>>, vector<96x128xf32>,
    %c0_i32_8 = arith.constant 0 : i32
    %10 = arith.cmpi eq, %arg1, %c0_i32_8 : i32
    %11 = arith.extui %10 : i1 to i32
    %c0_i32_9 = arith.constant 0 : i32
    %12 = arith.cmpi ne, %11, %c0_i32_9 : i32
    scf.if %12 {
      %c0_10 = arith.constant 0 : index
      %c0_11 = arith.constant 0 : index
      %13 = vector.load %arg5[%c0_10, %c0_11] : memref<96x128xf32, #tpu.memory_space<vmem>>, vector<96x128xf32>
      %cst = arith.constant dense<0.000000e+00> : vector<128xf32>
      %14 = vector.multi_reduction <add>, %13, %cst [0] : vector<96x128xf32> to vector<128xf32>
      %15 = vector.shape_cast %14 : vector<128xf32> to vector<1x128xf32>
      %16 = vector.shape_cast %15 : vector<1x128xf32> to vector<1x1x128xf32>
      %c0_12 = arith.constant 0 : index
      %c0_13 = arith.constant 0 : index
      %c0_14 = arith.constant 0 : index
      %17 = vector.load %arg4[%c0_12, %c0_13, %c0_14] : memref<1x1x128xf32, #tpu.memory_space<vmem>>, vector<1x1x128xf32>
      tpu.vector_store %arg4[%c0_12, %c0_13, %c0_14], %16 {strides = array<i32>} : memref<1x1x128xf32, #tpu.memory_space<vmem>>, vector<1x1x128xf32>,
    } else {
    }
    return
  }
  func.func @transform_0(%arg0: i32, %arg1: i32) -> (i32, i32) {
    %c1_i32 = arith.constant 1 : i32
    %0 = arith.muli %arg0, %c1_i32 : i32
    %1 = arith.addi %0, %arg1 : i32
    %c0_i32 = arith.constant 0 : i32
    %c0_i32_0 = arith.constant 0 : i32
    return %1, %c0_i32 : i32, i32
  }
  func.func @transform_1(%arg0: i32, %arg1: i32) -> (i32, i32) {
    %c1_i32 = arith.constant 1 : i32
    %0 = arith.muli %arg0, %c1_i32 : i32
    %1 = arith.addi %0, %arg1 : i32
    %c0_i32 = arith.constant 0 : i32
    %c0_i32_0 = arith.constant 0 : i32
    return %1, %c0_i32 : i32, i32
  }
  func.func @transform_2(%arg0: i32, %arg1: i32) -> (i32, i32, i32) {
    %c0_i32 = arith.constant 0 : i32
    %c0_i32_0 = arith.constant 0 : i32
    %c0_i32_1 = arith.constant 0 : i32
    return %arg0, %c0_i32, %c0_i32_0 : i32, i32, i32
  }
}

</mosaic_0001>

<llo_original>
// kernel: tpu_custom_call.1
$region0: #{tpu_custom_call.1}
  #allocation0 [shape = 'u32[]', space=smem, size = 0x4, offset = 0x4, fixed_abs, tag = 'smem constant byte address 0x4 - core index']
  #allocation1 [shape = 'u32[144,128]{1,0:T(1,128)}', space=vmem, size = 0x12000, scoped, tag = 'internal scratch']
  #allocation2 [shape = 'f32[96,128]{1,0:T(8,128)}', space=vmem, size = 0xc000, scoped, tag = 'scratch operand']
  %s0 = inlined_call_operand.hbm [shape: f32[96,128], index: 0, kind: input, shape index: {}]
  %s1 = inlined_call_operand.hbm [shape: f32[96,128], index: 1, kind: input, shape index: {}]
  %s2 = inlined_call_operand.hbm [shape: f32[1,1,128], index: 2, kind: output, shape index: {}]
  %s3 = sld [smem:[#allocation0]]
  $region34: #{tpu_custom_call.1} parent=0
    _
  %s5 = ssub.s32 1, %s3
  %s6 = scalar_select 0, %s5, %s3
  $region1: #{tpu_custom_call.1} parent=0
    #allocation3 [shape = 'u8[49152]{0}', space=vmem, size = 0xc000, scoped, tag = 'input window, operand 0, single buffered']
    #allocation4 [shape = 's32[1]{0}', space=sflag, size = 0x4, scoped, tag = 'scoped memory for tpu_custom_call.1']
    #allocation5 [shape = 's32[1]{0}', space=sflag, size = 0x4, scoped, tag = 'scoped memory for tpu_custom_call.1']
    #allocation6 [shape = 'u8[49152]{0}', space=vmem, size = 0xc000, scoped, tag = 'input window, operand 1, single buffered']
    #allocation7 [shape = 's32[1]{0}', space=sflag, size = 0x4, scoped, tag = 'scoped memory for tpu_custom_call.1']
    #allocation8 [shape = 'u8[512]{0}', space=vmem, size = 0x400, scoped, tag = 'output window, operand 0, single buffered']
    %7 = vsyncpa [#allocation4], 0
    %8 = vsyncpa [#allocation7], 0
    %9 = vsyncpa [#allocation5], 0
    // Predicated region
    $region2: #{tpu_custom_call.1} parent=1 // pred_check
      _
    $region3: #{tpu_custom_call.1} parent=1 // pred_check_branch
      %11 = sbr.rel (0) target = $region5
    $region4: #{tpu_custom_call.1} parent=1 // pred_region
      %s12 = sadd.s32 0, 0
      %s13 = smul.u32 12, %s12
      %s15 = ssub.s32 1536, 1536
      %16 = vsyncadd [#allocation4], %s15
      %s17 = smul.addr %s13, 128
      %s18 = scalar_lea.hbm %s0, %s17
      %s19 = sshll.u32 [#allocation3], 4
      %s20 = int_to_ptr.vmem [resolvable:$true] %s19
      %25 = dma.hbm_to_vmem [thread:$0]  %s18, 1536, %s20, [#allocation4], 128, 128, 8
    $region5: #{tpu_custom_call.1} parent=1 // pred_fallthru
      _
    // Predicated region
    $region6: #{tpu_custom_call.1} parent=1 // pred_check
      _
    $region7: #{tpu_custom_call.1} parent=1 // pred_check_branch
      %27 = sbr.rel (0) target = $region9
    $region8: #{tpu_custom_call.1} parent=1 // pred_region
      %s28 = sadd.s32 0, 0
      %s29 = smul.u32 12, %s28
      %s31 = ssub.s32 1536, 1536
      %32 = vsyncadd [#allocation7], %s31
      %s33 = smul.addr %s29, 128
      %s34 = scalar_lea.hbm %s1, %s33
      %s35 = sshll.u32 [#allocation6], 4
      %s36 = int_to_ptr.vmem [resolvable:$true] %s35
      %41 = dma.hbm_to_vmem [thread:$0]  %s34, 1536, %s36, [#allocation7], 128, 128, 8
    $region9: #{tpu_custom_call.1} parent=1 // pred_fallthru
      _
    // Predicated region
    $region10: #{tpu_custom_call.1} parent=1 // pred_check
      _
    $region11: #{tpu_custom_call.1} parent=1 // pred_check_branch
      %43 = sbr.rel (0) target = $region13
    $region12: #{tpu_custom_call.1} parent=1 // pred_region
      %44 = dma.done [#allocation4], 1536
    $region13: #{tpu_custom_call.1} parent=1 // pred_fallthru
      _
    // Predicated region
    $region14: #{tpu_custom_call.1} parent=1 // pred_check
      _
    $region15: #{tpu_custom_call.1} parent=1 // pred_check_branch
      %46 = sbr.rel (0) target = $region17
    $region16: #{tpu_custom_call.1} parent=1 // pred_region
      %47 = dma.done [#allocation7], 1536
    $region17: #{tpu_custom_call.1} parent=1 // pred_fallthru
      _
    %s48 = sadd.s32 0, 0
    %s49 = smul.u32 12, %s48
    %s50 = sadd.s32 0, 0
    %s51 = smul.u32 12, %s50
    %p52 = scmp.eq.s32.totalorder 0, 0
    // Predicated region
    $region18: #{tpu_custom_call.1} parent=1 // pred_check
      %p53 = pneg %p52
    $region19: #{tpu_custom_call.1} parent=1 // pred_check_branch
      %55 = sbr.rel (%p53) target = $region21
    $region20: #{tpu_custom_call.1} parent=1 // pred_region
      %56 = vst [vmem:[#allocation2] sm:$0xff] 0.0
      %57 = vst [vmem:[#allocation2 + $0x8] sm:$0xff] 0.0
      %58 = vst [vmem:[#allocation2 + $0x10] sm:$0xff] 0.0
      %59 = vst [vmem:[#allocation2 + $0x18] sm:$0xff] 0.0
      %60 = vst [vmem:[#allocation2 + $0x20] sm:$0xff] 0.0
      %61 = vst [vmem:[#allocation2 + $0x28] sm:$0xff] 0.0
      %62 = vst [vmem:[#allocation2 + $0x30] sm:$0xff] 0.0
      %63 = vst [vmem:[#allocation2 + $0x38] sm:$0xff] 0.0
      %64 = vst [vmem:[#allocation2 + $0x40] sm:$0xff] 0.0
      %65 = vst [vmem:[#allocation2 + $0x48] sm:$0xff] 0.0
      %66 = vst [vmem:[#allocation2 + $0x50] sm:$0xff] 0.0
      %67 = vst [vmem:[#allocation2 + $0x58] sm:$0xff] 0.0
    $region21: #{tpu_custom_call.1} parent=1 // pred_fallthru
      _
    %v68 = vld [vmem:[#allocation3] sm:$0xff]
    %v69 = vld [vmem:[#allocation3 + $0x8] sm:$0xff]
    %v70 = vld [vmem:[#allocation3 + $0x10] sm:$0xff]
    %v71 = vld [vmem:[#allocation3 + $0x18] sm:$0xff]
    %v72 = vld [vmem:[#allocation3 + $0x20] sm:$0xff]
    %v73 = vld [vmem:[#allocation3 + $0x28] sm:$0xff]
    %v74 = vld [vmem:[#allocation3 + $0x30] sm:$0xff]
    %v75 = vld [vmem:[#allocation3 + $0x38] sm:$0xff]
    %v76 = vld [vmem:[#allocation3 + $0x40] sm:$0xff]
    %v77 = vld [vmem:[#allocation3 + $0x48] sm:$0xff]
    %v78 = vld [vmem:[#allocation3 + $0x50] sm:$0xff]
    %v79 = vld [vmem:[#allocation3 + $0x58] sm:$0xff]
    %v80 = vld [vmem:[#allocation6] sm:$0xff]
    %v81 = vld [vmem:[#allocation6 + $0x8] sm:$0xff]
    %v82 = vld [vmem:[#allocation6 + $0x10] sm:$0xff]
    %v83 = vld [vmem:[#allocation6 + $0x18] sm:$0xff]
    %v84 = vld [vmem:[#allocation6 + $0x20] sm:$0xff]
    %v85 = vld [vmem:[#allocation6 + $0x28] sm:$0xff]
    %v86 = vld [vmem:[#allocation6 + $0x30] sm:$0xff]
    %v87 = vld [vmem:[#allocation6 + $0x38] sm:$0xff]
    %v88 = vld [vmem:[#allocation6 + $0x40] sm:$0xff]
    %v89 = vld [vmem:[#allocation6 + $0x48] sm:$0xff]
    %v90 = vld [vmem:[#allocation6 + $0x50] sm:$0xff]
    %v91 = vld [vmem:[#allocation6 + $0x58] sm:$0xff]
    %v92 = vsub.f32 %v68, %v80
    %v93 = vsub.f32 %v69, %v81
    %v94 = vsub.f32 %v70, %v82
    %v95 = vsub.f32 %v71, %v83
    %v96 = vsub.f32 %v72, %v84
    %v97 = vsub.f32 %v73, %v85
    %v98 = vsub.f32 %v74, %v86
    %v99 = vsub.f32 %v75, %v87
    %v100 = vsub.f32 %v76, %v88
    %v101 = vsub.f32 %v77, %v89
    %v102 = vsub.f32 %v78, %v90
    %v103 = vsub.f32 %v79, %v91
    %v104 = vmul.f32 %v92, %v92
    %v105 = vmul.f32 %v93, %v93
    %v106 = vmul.f32 %v94, %v94
    %v107 = vmul.f32 %v95, %v95
    %v108 = vmul.f32 %v96, %v96
    %v109 = vmul.f32 %v97, %v97
    %v110 = vmul.f32 %v98, %v98
    %v111 = vmul.f32 %v99, %v99
    %v112 = vmul.f32 %v100, %v100
    %v113 = vmul.f32 %v101, %v101
    %v114 = vmul.f32 %v102, %v102
    %v115 = vmul.f32 %v103, %v103
    %v116 = vld [vmem:[#allocation2] sm:$0xff]
    %v117 = vld [vmem:[#allocation2 + $0x8] sm:$0xff]
    %v118 = vld [vmem:[#allocation2 + $0x10] sm:$0xff]
    %v119 = vld [vmem:[#allocation2 + $0x18] sm:$0xff]
    %v120 = vld [vmem:[#allocation2 + $0x20] sm:$0xff]
    %v121 = vld [vmem:[#allocation2 + $0x28] sm:$0xff]
    %v122 = vld [vmem:[#allocation2 + $0x30] sm:$0xff]
    %v123 = vld [vmem:[#allocation2 + $0x38] sm:$0xff]
    %v124 = vld [vmem:[#allocation2 + $0x40] sm:$0xff]
    %v125 = vld [vmem:[#allocation2 + $0x48] sm:$0xff]
    %v126 = vld [vmem:[#allocation2 + $0x50] sm:$0xff]
    %v127 = vld [vmem:[#allocation2 + $0x58] sm:$0xff]
    %v128 = vadd.f32 %v116, %v104
    %v129 = vadd.f32 %v117, %v105
    %v130 = vadd.f32 %v118, %v106
    %v131 = vadd.f32 %v119, %v107
    %v132 = vadd.f32 %v120, %v108
    %v133 = vadd.f32 %v121, %v109
    %v134 = vadd.f32 %v122, %v110
    %v135 = vadd.f32 %v123, %v111
    %v136 = vadd.f32 %v124, %v112
    %v137 = vadd.f32 %v125, %v113
    %v138 = vadd.f32 %v126, %v114
    %v139 = vadd.f32 %v127, %v115
    %140 = vst [vmem:[#allocation2] sm:$0xff] %v128
    %141 = vst [vmem:[#allocation2 + $0x8] sm:$0xff] %v129
    %142 = vst [vmem:[#allocation2 + $0x10] sm:$0xff] %v130
    %143 = vst [vmem:[#allocation2 + $0x18] sm:$0xff] %v131
    %144 = vst [vmem:[#allocation2 + $0x20] sm:$0xff] %v132
    %145 = vst [vmem:[#allocation2 + $0x28] sm:$0xff] %v133
    %146 = vst [vmem:[#allocation2 + $0x30] sm:$0xff] %v134
    %147 = vst [vmem:[#allocation2 + $0x38] sm:$0xff] %v135
    %148 = vst [vmem:[#allocation2 + $0x40] sm:$0xff] %v136
    %149 = vst [vmem:[#allocation2 + $0x48] sm:$0xff] %v137
    %150 = vst [vmem:[#allocation2 + $0x50] sm:$0xff] %v138
    %151 = vst [vmem:[#allocation2 + $0x58] sm:$0xff] %v139
    // Predicated region
    $region22: #{tpu_custom_call.1} parent=1 // pred_check
      %p152 = pneg %p52
    $region23: #{tpu_custom_call.1} parent=1 // pred_check_branch
      %154 = sbr.rel (%p152) target = $region25
    $region24: #{tpu_custom_call.1} parent=1 // pred_region
      %v155 = vld [vmem:[#allocation2] sm:$0xff]
      %v156 = vld [vmem:[#allocation2 + $0x8] sm:$0xff]
      %v157 = vld [vmem:[#allocation2 + $0x10] sm:$0xff]
      %v158 = vld [vmem:[#allocation2 + $0x18] sm:$0xff]
      %v159 = vld [vmem:[#allocation2 + $0x20] sm:$0xff]
      %v160 = vld [vmem:[#allocation2 + $0x28] sm:$0xff]
      %v161 = vld [vmem:[#allocation2 + $0x30] sm:$0xff]
      %v162 = vld [vmem:[#allocation2 + $0x38] sm:$0xff]
      %v163 = vld [vmem:[#allocation2 + $0x40] sm:$0xff]
      %v164 = vld [vmem:[#allocation2 + $0x48] sm:$0xff]
      %v165 = vld [vmem:[#allocation2 + $0x50] sm:$0xff]
      %v166 = vld [vmem:[#allocation2 + $0x58] sm:$0xff]
      %v167 = vadd.f32 %v155, %v156
      %v168 = vadd.f32 %v167, %v157
      %v169 = vadd.f32 %v168, %v158
      %v170 = vadd.f32 %v169, %v159
      %v171 = vadd.f32 %v170, %v160
      %v172 = vadd.f32 %v171, %v161
      %v173 = vadd.f32 %v172, %v162
      %v174 = vadd.f32 %v173, %v163
      %v175 = vadd.f32 %v174, %v164
      %v176 = vadd.f32 %v175, %v165
      %v177 = vadd.f32 %v176, %v166
      %v178 = vrot.slane %v177, 4
      %v179 = vadd.f32 %v177, %v178
      %v180 = vrot.slane %v179, 2
      %v181 = vadd.f32 %v179, %v180
      %v182 = vrot.slane %v181, 1
      %v183 = vadd.f32 %v181, %v182
      %184 = vst [vmem:[#allocation8] sm:$0x1] %v183
    $region25: #{tpu_custom_call.1} parent=1 // pred_fallthru
      _
    // Predicated region
    $region26: #{tpu_custom_call.1} parent=1 // pred_check
      _
    $region27: #{tpu_custom_call.1} parent=1 // pred_check_branch
      %186 = sbr.rel (0) target = $region29
    $region28: #{tpu_custom_call.1} parent=1 // pred_region
      %s188 = ssub.s32 16, 16
      %189 = vsyncadd [#allocation5], %s188
      %s191 = sshll.u32 [#allocation8], 4
      %s192 = int_to_ptr.vmem [resolvable:$true] %s191
      %194 = dma.vmem_to_hbm [thread:$0]  %s192, 16, %s2, [#allocation5]
    $region29: #{tpu_custom_call.1} parent=1 // pred_fallthru
      _
    // Predicated region
    $region30: #{tpu_custom_call.1} parent=1 // pred_check
      _
    $region31: #{tpu_custom_call.1} parent=1 // pred_check_branch
      %196 = sbr.rel (0) target = $region33
    $region32: #{tpu_custom_call.1} parent=1 // pred_region
      %197 = dma.done [#allocation5], 16
    $region33: #{tpu_custom_call.1} parent=1 // pred_fallthru
      _
    %198 = vsyncpa [#allocation4], 1
    %199 = vsyncpa [#allocation7], 1
    %200 = vsyncpa [#allocation5], 1

</llo_original>
